<compile_context>
chip_gen: v5e
topology: v5e:2x2
jax: 0.10.0
libtpu: 0.0.40
codegen_flags: <defaults>
</compile_context>

<pallas_src>
import math

import jax
import jax.numpy as jnp
from jax.experimental import pallas as pl
from jax.experimental.pallas import tpu as pltpu


# ----------------------------------------------------------------------------
# Kernel: tile-wise  out = x + pe  (pe broadcast over the size-1 axis)
# ----------------------------------------------------------------------------
def add_pe_kernel(x_ref, pe_ref, o_ref):
    # pe_ref has a size-1 axis where x_ref has the batch axis -> VPU broadcast.
    # Addition promotes to f32 (pe is f32); result cast back to x dtype.
    o_ref[...] = (x_ref[...] + pe_ref[...]).astype(o_ref.dtype)


# ----------------------------------------------------------------------------
# Buffer construction (PyTorch __init__ / register_buffer analogue).
# ----------------------------------------------------------------------------
def make_positional_encoding_table(d_model, max_len=5000):
    position = jnp.arange(max_len, dtype=jnp.float32)[:, None]          # (L, 1)
    div_term = jnp.exp(
        jnp.arange(0, d_model, 2, dtype=jnp.float32)
        * (-math.log(10000.0) / d_model)
    )                                                                    # (D/2,)
    pe = jnp.zeros((max_len, d_model), jnp.float32)
    pe = pe.at[:, 0::2].set(jnp.sin(position * div_term))
    pe = pe.at[:, 1::2].set(jnp.cos(position * div_term))
    return pe                                                            # (L, D)


def _pick_tile_rows(rows, bytes_per_row, target_bytes=2 << 20):
    """Leading-axis tile keeping each x/out tile around ~2 MiB.

    Double-buffered x + out (4 buffers) plus the thin pe block then totals
    ~8-9 MiB, inside the scoped-VMEM default on v5e/v6e/v7x, while per-tile
    size is large enough to amortize the ~0.35 us per-grid-step overhead."""
    return int(max(1, min(rows, target_bytes // max(1, bytes_per_row))))


# ----------------------------------------------------------------------------
# Forward wrapper.
# ----------------------------------------------------------------------------
def positional_encoding_forward(x, pe, *, batch_first=False, block_rows=None):
    """x: (S, B, D) if batch_first=False (module default) else (B, S, D).
    pe: (max_len, D) float32 table from make_positional_encoding_table."""
    itemsize = jnp.dtype(x.dtype).itemsize

    if batch_first:
        B, S, D = x.shape
        rows = B
        pe_slice = jax.lax.slice_in_dim(pe, 0, S, axis=0)[None, :, :]   # (1,S,D)
        tile = block_rows or _pick_tile_rows(rows, S * D * itemsize)
        grid = (pl.cdiv(rows, tile),)
        x_spec = pl.BlockSpec((tile, S, D), lambda i: (i, 0, 0))
        # Constant index_map -> pe block stays resident in VMEM (one DMA).
        pe_spec = pl.BlockSpec((1, S, D), lambda i: (0, 0, 0))
        out_spec = pl.BlockSpec((tile, S, D), lambda i: (i, 0, 0))
    else:
        S, B, D = x.shape
        rows = S
        pe_slice = jax.lax.slice_in_dim(pe, 0, S, axis=0)[:, None, :]   # (S,1,D)
        tile = block_rows or _pick_tile_rows(rows, B * D * itemsize)
        grid = (pl.cdiv(rows, tile),)
        x_spec = pl.BlockSpec((tile, B, D), lambda i: (i, 0, 0))
        pe_spec = pl.BlockSpec((tile, 1, D), lambda i: (i, 0, 0))       # thin
        out_spec = pl.BlockSpec((tile, B, D), lambda i: (i, 0, 0))

    return pl.pallas_call(
        add_pe_kernel,
        out_shape=jax.ShapeDtypeStruct(x.shape, x.dtype),
        grid=grid,
        in_specs=[x_spec, pe_spec],
        out_specs=out_spec,
        compiler_params=pltpu.CompilerParams(
            dimension_semantics=("parallel",)),
    )(x, pe_slice)


# ----------------------------------------------------------------------------
# Pure-JAX reference (eval-mode dropout == identity).
# ----------------------------------------------------------------------------
def positional_encoding_ref(x, pe, *, batch_first=False):
    if batch_first:
        return x + pe[None, : x.shape[1], :]
    return x + pe[: x.shape[0], None, :]


if __name__ == "__main__":
    d_model = 128        # embed dim (lane-dense: multiple of 128)
    seq_len = 8
    batch = 4
    max_len = 512

    key = jax.random.PRNGKey(0)
    k1, k2 = jax.random.split(key)

    pe = make_positional_encoding_table(d_model, max_len=max_len)

    # batch_first=False (module default): x is (S, B, D)
    x_sbd = jax.random.normal(k1, (seq_len, batch, d_model), dtype=jnp.float32)
    out = positional_encoding_forward(x_sbd, pe, batch_first=False)
    out = jax.block_until_ready(out)
    ref = positional_encoding_ref(x_sbd, pe, batch_first=False)
    assert out.shape == x_sbd.shape
    assert jnp.allclose(out, ref, atol=1e-6, rtol=1e-6), "mismatch (seq-first)"

    # batch_first=True: x is (B, S, D)
    x_bsd = jax.random.normal(k2, (batch, seq_len, d_model), dtype=jnp.float32)
    out_bf = positional_encoding_forward(x_bsd, pe, batch_first=True)
    out_bf = jax.block_until_ready(out_bf)
    ref_bf = positional_encoding_ref(x_bsd, pe, batch_first=True)
    assert out_bf.shape == x_bsd.shape
    assert jnp.allclose(out_bf, ref_bf, atol=1e-6, rtol=1e-6), "mismatch (batch-first)"

    print("KERNEL_OK")
</pallas_src>

<mosaic_0001>
module attributes {stable_mosaic.version = 11 : i64} {
  func.func @add_pe_kernel(%arg0: i32, %arg1: memref<8x4x128xf32, #tpu.memory_space<vmem>>, %arg2: memref<8x1x128xf32, #tpu.memory_space<vmem>>, %arg3: memref<8x4x128xf32, #tpu.memory_space<vmem>>) attributes {dimension_semantics = [#tpu.dimension_semantics<parallel>], iteration_bounds = array<i64: 1>, scalar_prefetch = 0 : i64, scratch_operands = 0 : i64, tpu.core_type = #tpu.core_type<tc>, window_params = [{transform_indices = @transform_0, window_bounds = array<i64: 8, 4, 128>}, {transform_indices = @transform_1, window_bounds = array<i64: 8, 1, 128>}, {transform_indices = @transform_2, window_bounds = array<i64: 8, 4, 128>}]} {
    %c0 = arith.constant 0 : index
    %c0_0 = arith.constant 0 : index
    %c0_1 = arith.constant 0 : index
    %0 = vector.load %arg1[%c0, %c0_0, %c0_1] : memref<8x4x128xf32, #tpu.memory_space<vmem>>, vector<8x4x128xf32>
    %c0_2 = arith.constant 0 : index
    %c0_3 = arith.constant 0 : index
    %c0_4 = arith.constant 0 : index
    %1 = vector.load %arg2[%c0_2, %c0_3, %c0_4] : memref<8x1x128xf32, #tpu.memory_space<vmem>>, vector<8x1x128xf32>
    %2 = vector.broadcast %1 : vector<8x1x128xf32> to vector<8x4x128xf32>
    %3 = arith.addf %0, %2 : vector<8x4x128xf32>
    %c0_5 = arith.constant 0 : index
    %c0_6 = arith.constant 0 : index
    %c0_7 = arith.constant 0 : index
    %4 = vector.load %arg3[%c0_5, %c0_6, %c0_7] : memref<8x4x128xf32, #tpu.memory_space<vmem>>, vector<8x4x128xf32>
    tpu.vector_store %arg3[%c0_5, %c0_6, %c0_7], %3 {strides = array<i32>} : memref<8x4x128xf32, #tpu.memory_space<vmem>>, vector<8x4x128xf32>,
    return
  }
  func.func @transform_0(%arg0: i32) -> (i32, i32, i32) {
    %c0_i32 = arith.constant 0 : i32
    %c0_i32_0 = arith.constant 0 : i32
    %c0_i32_1 = arith.constant 0 : i32
    return %arg0, %c0_i32, %c0_i32_0 : i32, i32, i32
  }
  func.func @transform_1(%arg0: i32) -> (i32, i32, i32) {
    %c0_i32 = arith.constant 0 : i32
    %c0_i32_0 = arith.constant 0 : i32
    %c0_i32_1 = arith.constant 0 : i32
    return %arg0, %c0_i32, %c0_i32_0 : i32, i32, i32
  }
  func.func @transform_2(%arg0: i32) -> (i32, i32, i32) {
    %c0_i32 = arith.constant 0 : i32
    %c0_i32_0 = arith.constant 0 : i32
    %c0_i32_1 = arith.constant 0 : i32
    return %arg0, %c0_i32, %c0_i32_0 : i32, i32, i32
  }
}

</mosaic_0001>

<llo_original>
// kernel: tpu_custom_call.1
$region0: #{tpu_custom_call.1}
  #allocation0 [shape = 'u32[]', space=smem, size = 0x4, offset = 0x4, fixed_abs, tag = 'smem constant byte address 0x4 - core index']
  #allocation1 [shape = 'u32[72,128]{1,0:T(1,128)}', space=vmem, size = 0x9000, scoped, tag = 'internal scratch']
  %s0 = inlined_call_operand.hbm [shape: f32[8,4,128], index: 0, kind: input, shape index: {}]
  %s1 = inlined_call_operand.hbm [shape: f32[8,1,128], index: 1, kind: input, shape index: {}]
  %s2 = inlined_call_operand.hbm [shape: f32[8,4,128], index: 2, kind: output, shape index: {}]
  %s3 = sld [smem:[#allocation0]]
  $region26: #{tpu_custom_call.1} parent=0
    _
  %s5 = ssub.s32 1, %s3
  %s6 = scalar_select 0, %s5, %s3
  $region1: #{tpu_custom_call.1} parent=0
    #allocation2 [shape = 'u8[16384]{0}', space=vmem, size = 0x4000, scoped, tag = 'input window, operand 0, single buffered']
    #allocation3 [shape = 's32[1]{0}', space=sflag, size = 0x4, scoped, tag = 'scoped memory for tpu_custom_call.1']
    #allocation4 [shape = 's32[1]{0}', space=sflag, size = 0x4, scoped, tag = 'scoped memory for tpu_custom_call.1']
    #allocation5 [shape = 'u8[4096]{0}', space=vmem, size = 0x1000, scoped, tag = 'input window, operand 1, single buffered']
    #allocation6 [shape = 's32[1]{0}', space=sflag, size = 0x4, scoped, tag = 'scoped memory for tpu_custom_call.1']
    #allocation7 [shape = 'u8[16384]{0}', space=vmem, size = 0x4000, scoped, tag = 'output window, operand 0, single buffered']
    %7 = vsyncpa [#allocation3], 0
    %8 = vsyncpa [#allocation6], 0
    %9 = vsyncpa [#allocation4], 0
    // Predicated region
    $region2: #{tpu_custom_call.1} parent=1 // pred_check
      _
    $region3: #{tpu_custom_call.1} parent=1 // pred_check_branch
      %11 = sbr.rel (0) target = $region5
    $region4: #{tpu_custom_call.1} parent=1 // pred_region
      %13 = vsyncadd [#allocation3], 0
      %s14 = sshll.u32 %s0, 4
      %s15 = int_to_ptr.hbm [resolvable:$true] %s14
      %s16 = sshll.u32 [#allocation2], 4
      %s17 = int_to_ptr.vmem [resolvable:$true] %s16
      %22 = dma.hbm_to_vmem [thread:$0]  %s15, 512, %s17, [#allocation3], 64, 64, 4
    $region5: #{tpu_custom_call.1} parent=1 // pred_fallthru
      _
    // Predicated region
    $region6: #{tpu_custom_call.1} parent=1 // pred_check
      _
    $region7: #{tpu_custom_call.1} parent=1 // pred_check_branch
      %24 = sbr.rel (0) target = $region9
    $region8: #{tpu_custom_call.1} parent=1 // pred_region
      %26 = vsyncadd [#allocation6], 0
      %s27 = sshll.u32 %s1, 4
      %s28 = int_to_ptr.hbm [resolvable:$true] %s27
      %s29 = sshll.u32 [#allocation5], 4
      %s30 = int_to_ptr.vmem [resolvable:$true] %s29
      %35 = dma.hbm_to_vmem [thread:$0]  %s28, 128, %s30, [#allocation6], 16, 16, 1
    $region9: #{tpu_custom_call.1} parent=1 // pred_fallthru
      _
    // Predicated region
    $region10: #{tpu_custom_call.1} parent=1 // pred_check
      _
    $region11: #{tpu_custom_call.1} parent=1 // pred_check_branch
      %37 = sbr.rel (0) target = $region13
    $region12: #{tpu_custom_call.1} parent=1 // pred_region
      %39 = dma.done [#allocation3], 512
    $region13: #{tpu_custom_call.1} parent=1 // pred_fallthru
      _
    // Predicated region
    $region14: #{tpu_custom_call.1} parent=1 // pred_check
      _
    $region15: #{tpu_custom_call.1} parent=1 // pred_check_branch
      %41 = sbr.rel (0) target = $region17
    $region16: #{tpu_custom_call.1} parent=1 // pred_region
      %43 = dma.done [#allocation6], 128
    $region17: #{tpu_custom_call.1} parent=1 // pred_fallthru
      _
    %v44 = vld [vmem:[#allocation2] sm:$0xf]
    %v45 = vld [vmem:[#allocation2 + $0x4] sm:$0xf]
    %v46 = vld [vmem:[#allocation2 + $0x8] sm:$0xf]
    %v47 = vld [vmem:[#allocation2 + $0xc] sm:$0xf]
    %v48 = vld [vmem:[#allocation2 + $0x10] sm:$0xf]
    %v49 = vld [vmem:[#allocation2 + $0x14] sm:$0xf]
    %v50 = vld [vmem:[#allocation2 + $0x18] sm:$0xf]
    %v51 = vld [vmem:[#allocation2 + $0x1c] sm:$0xf]
    %v52 = vld [vmem:[#allocation5] sm:$0x1]
    %v53 = vld [vmem:[#allocation5 + $0x1] sm:$0x1]
    %v54 = vld [vmem:[#allocation5 + $0x2] sm:$0x1]
    %v55 = vld [vmem:[#allocation5 + $0x3] sm:$0x1]
    %v56 = vld [vmem:[#allocation5 + $0x4] sm:$0x1]
    %v57 = vld [vmem:[#allocation5 + $0x5] sm:$0x1]
    %v58 = vld [vmem:[#allocation5 + $0x6] sm:$0x1]
    %v59 = vld [vmem:[#allocation5 + $0x7] sm:$0x1]
    %v68 = vperm.slane %v52, 0
    %v69 = vperm.slane %v53, 0
    %v70 = vperm.slane %v54, 0
    %v71 = vperm.slane %v55, 0
    %v72 = vperm.slane %v56, 0
    %v73 = vperm.slane %v57, 0
    %v74 = vperm.slane %v58, 0
    %v75 = vperm.slane %v59, 0
    %v84 = vadd.f32 %v44, %v68
    %v85 = vadd.f32 %v45, %v69
    %v86 = vadd.f32 %v46, %v70
    %v87 = vadd.f32 %v47, %v71
    %v88 = vadd.f32 %v48, %v72
    %v89 = vadd.f32 %v49, %v73
    %v90 = vadd.f32 %v50, %v74
    %v91 = vadd.f32 %v51, %v75
    %92 = vst [vmem:[#allocation7] sm:$0xf] %v84
    %93 = vst [vmem:[#allocation7 + $0x4] sm:$0xf] %v85
    %94 = vst [vmem:[#allocation7 + $0x8] sm:$0xf] %v86
    %95 = vst [vmem:[#allocation7 + $0xc] sm:$0xf] %v87
    %96 = vst [vmem:[#allocation7 + $0x10] sm:$0xf] %v88
    %97 = vst [vmem:[#allocation7 + $0x14] sm:$0xf] %v89
    %98 = vst [vmem:[#allocation7 + $0x18] sm:$0xf] %v90
    %99 = vst [vmem:[#allocation7 + $0x1c] sm:$0xf] %v91
    // Predicated region
    $region18: #{tpu_custom_call.1} parent=1 // pred_check
      _
    $region19: #{tpu_custom_call.1} parent=1 // pred_check_branch
      %101 = sbr.rel (0) target = $region21
    $region20: #{tpu_custom_call.1} parent=1 // pred_region
      %103 = vsyncadd [#allocation4], 0
      %s104 = sshll.u32 [#allocation7], 4
      %s105 = int_to_ptr.vmem [resolvable:$true] %s104
      %s106 = sshll.u32 %s2, 4
      %s107 = int_to_ptr.hbm [resolvable:$true] %s106
      %112 = dma.vmem_to_hbm [thread:$0]  %s105, 512, %s107, [#allocation4], 64, 64, 4
    $region21: #{tpu_custom_call.1} parent=1 // pred_fallthru
      _
    // Predicated region
    $region22: #{tpu_custom_call.1} parent=1 // pred_check
      _
    $region23: #{tpu_custom_call.1} parent=1 // pred_check_branch
      %114 = sbr.rel (0) target = $region25
    $region24: #{tpu_custom_call.1} parent=1 // pred_region
      %116 = dma.done [#allocation4], 512
    $region25: #{tpu_custom_call.1} parent=1 // pred_fallthru
      _
    %117 = vsyncpa [#allocation3], 1
    %118 = vsyncpa [#allocation6], 1
    %119 = vsyncpa [#allocation4], 1

</llo_original>
